<compile_context>
chip_gen: v5e
topology: v5e:2x2
jax: 0.10.0
libtpu: 0.0.40
codegen_flags: <defaults>
</compile_context>

<pallas_src>
import jax
import jax.numpy as jnp
from jax.experimental import pallas as pl
from jax.experimental.pallas import tpu as pltpu

H = 0.5          # self.h in GaussianAntecedent
EPS = 1e-8       # self.eps
PAD_BIAS = 1e30  # bias for padded (phantom) rules -> logits ~ -1e30 -> softmax weight 0


def _round_up(a, b):
    return ((a + b - 1) // b) * b


def htsk_kernel(x_ref, w1_ref, w2_ref, b_ref, o_ref):
    # x_ref : [TB, D]     f32  (unpadded feature axis)
    # w1_ref: [D, R_pad]  f32  == 2 * centers * w        (grid-invariant)
    # w2_ref: [D, R_pad]  f32  == -w                     (grid-invariant)
    # b_ref : [1, R_pad]  f32  == sum_d c^2 * w (1/D already folded into w);
    #                           padded rules carry +1e30.
    x = x_ref[...]

    # Two accumulating MXU dots instead of one dot on a concatenated LHS.
    logits = jnp.dot(x, w1_ref[...], preferred_element_type=jnp.float32)
    logits = logits + jnp.dot(x * x, w2_ref[...],
                              preferred_element_type=jnp.float32)
    logits = logits - b_ref[...]                               # [TB, R_pad]

    # Row softmax over the (padded) rule axis; padded rules have logits
    # ~ -1e30 so exp underflows to exactly 0.
    m = jnp.max(logits, axis=1, keepdims=True)
    e = jnp.exp(logits - m)
    denom = jnp.sum(e, axis=1, keepdims=True)
    inv = pl.reciprocal(denom, approx=True)       # EUP slot (otherwise idle)
    inv = inv * (2.0 - denom * inv)               # one Newton step -> ~f32-exact
    o_ref[...] = (e * inv).astype(o_ref.dtype)


def ante_gaussian_htsk(x, centers, sigmas, *, block_n=512):
    """x: [N, D] f32; centers/sigmas: [D, R] f32; returns frs [N, R] f32."""
    N, D = x.shape
    D2, R = centers.shape
    assert D == D2
    x = x.astype(jnp.float32)

    # ---- hoisted, grid-invariant parameter prep (once, outside the kernel) ----
    w = (H / (sigmas * sigmas) + EPS) / D                 # [D, R]; 1/D implements torch.mean
    cw = centers * w                                      # [D, R]
    bias = jnp.sum(centers * cw, axis=0, keepdims=True)   # [1, R] == sum_d c^2*w (1/D inside w)

    # ---- lane-dense padding of the rule axis ONLY (weights/bias; x untouched) ----
    R_pad = _round_up(R, 128)
    w1 = jnp.pad(2.0 * cw, ((0, 0), (0, R_pad - R)))              # [D, R_pad]
    w2 = jnp.pad(-w, ((0, 0), (0, R_pad - R)))                    # [D, R_pad]
    bias_p = jnp.pad(bias, ((0, 0), (0, R_pad - R)),
                     constant_values=PAD_BIAS)                    # [1, R_pad]

    # ---- batch tile selection (no N padding; ragged last tile is masked) ----
    if N <= block_n:
        tb = N                              # full-dim block (always legal)
    else:
        tb = max(8, (block_n // 8) * 8)     # sublane-aligned tile

    def vmem_est(t):
        tiles = 2 * t * (D + R_pad) * 4               # double-buffered x + out tiles
        weights = 2 * (2 * D * R_pad + R_pad) * 4     # W1/W2/bias (+ 2nd pipeline buffer)
        scratch = t * (D + 2 * R_pad) * 4             # x*x, logits, e intermediates
        return tiles + weights + scratch

    VMEM_BUDGET = 48 * 1024 * 1024                    # fits v7x's 64 MiB with headroom
    while tb > 8 and vmem_est(tb) > VMEM_BUDGET:
        tb = max(8, (tb // 2 // 8) * 8)

    vmem_limit = int(min(56 * 1024 * 1024,
                         max(2 * vmem_est(tb), 16 * 1024 * 1024)))

    grid = (pl.cdiv(N, tb),)

    out = pl.pallas_call(
        htsk_kernel,
        out_shape=jax.ShapeDtypeStruct((N, R_pad), jnp.float32),
        grid_spec=pltpu.PrefetchScalarGridSpec(
            num_scalar_prefetch=0,
            grid=grid,
            in_specs=[
                pl.BlockSpec((tb, D), lambda i: (i, 0)),        # batch tile of x (full D)
                pl.BlockSpec((D, R_pad), lambda i: (0, 0)),     # W1 = 2*c*w  (resident)
                pl.BlockSpec((D, R_pad), lambda i: (0, 0)),     # W2 = -w     (resident)
                pl.BlockSpec((1, R_pad), lambda i: (0, 0)),     # bias row    (resident)
            ],
            out_specs=pl.BlockSpec((tb, R_pad), lambda i: (i, 0)),
        ),
        compiler_params=pltpu.CompilerParams(
            dimension_semantics=("parallel",),  # batch tiles shard across TCs on v7x
            vmem_limit_bytes=vmem_limit,
        ),
    )(x, w1, w2, bias_p)

    return out[:, :R]


def reference(x, centers, sigmas):
    """Pure-JAX reference mirroring the PyTorch forward literally."""
    mfs = -(x[:, :, None] - centers[None, :, :]) ** 2 * (H / sigmas ** 2 + EPS)
    logits = jnp.mean(mfs, axis=1)
    return jax.nn.softmax(logits, axis=1)


if __name__ == "__main__":
    # Small shapes: batch N=16, in_dim D=16, n_rules R=8
    N, D, R = 16, 16, 8

    key = jax.random.PRNGKey(0)
    kx, kc, ks = jax.random.split(key, 3)

    x = jax.random.normal(kx, (N, D), dtype=jnp.float32)
    # Deterministic synthetic "init_model": centers ~ N(0,1), sigmas ~ N(1, 0.2)
    centers = jax.random.normal(kc, (D, R), dtype=jnp.float32)
    sigmas = 1.0 + 0.2 * jax.random.normal(ks, (D, R), dtype=jnp.float32)

    # TODO(synk): init_model's KMeans-based center initialization is host-side
    # setup, not part of the forward pass, and is not translated.
    frs = ante_gaussian_htsk(x, centers, sigmas)
    frs = jax.block_until_ready(frs)

    frs_ref = reference(x, centers, sigmas)
    assert frs.shape == (N, R)
    assert jnp.allclose(jnp.sum(frs, axis=1), 1.0, atol=1e-5)
    assert jnp.allclose(frs, frs_ref, rtol=1e-4, atol=1e-5), "mismatch vs reference"

    print("KERNEL_OK")
</pallas_src>

<mosaic_0001>
module attributes {stable_mosaic.version = 11 : i64} {
  func.func @htsk_kernel(%arg0: i32, %arg1: memref<16x16xf32, #tpu.memory_space<vmem>>, %arg2: memref<16x128xf32, #tpu.memory_space<vmem>>, %arg3: memref<16x128xf32, #tpu.memory_space<vmem>>, %arg4: memref<1x128xf32, #tpu.memory_space<vmem>>, %arg5: memref<16x128xf32, #tpu.memory_space<vmem>>) attributes {dimension_semantics = [#tpu.dimension_semantics<parallel>], iteration_bounds = array<i64: 1>, scalar_prefetch = 0 : i64, scratch_operands = 0 : i64, tpu.core_type = #tpu.core_type<tc>, window_params = [{transform_indices = @transform_0, window_bounds = array<i64: 16, 16>}, {pipeline_mode = #tpu.pipeline_mode<synchronous>, transform_indices = @transform_1, window_bounds = array<i64: 16, 128>}, {pipeline_mode = #tpu.pipeline_mode<synchronous>, transform_indices = @transform_2, window_bounds = array<i64: 16, 128>}, {pipeline_mode = #tpu.pipeline_mode<synchronous>, transform_indices = @transform_3, window_bounds = array<i64: 1, 128>}, {transform_indices = @transform_4, window_bounds = array<i64: 16, 128>}]} {
    %c0 = arith.constant 0 : index
    %c0_0 = arith.constant 0 : index
    %0 = vector.load %arg1[%c0, %c0_0] : memref<16x16xf32, #tpu.memory_space<vmem>>, vector<16x16xf32>
    %c0_1 = arith.constant 0 : index
    %c0_2 = arith.constant 0 : index
    %1 = vector.load %arg2[%c0_1, %c0_2] : memref<16x128xf32, #tpu.memory_space<vmem>>, vector<16x128xf32>
    %cst = arith.constant dense<0.000000e+00> : vector<16x128xf32>
    %2 = tpu.matmul %0, %1, %cst {dimension_numbers = #tpu.dot_dimension_numbers<[1], [0], [0], [1], [0, 0, 1, 1], [], []>} : vector<16x16xf32>, vector<16x128xf32>, vector<16x128xf32> -> vector<16x128xf32>
    %3 = arith.mulf %0, %0 : vector<16x16xf32>
    %c0_3 = arith.constant 0 : index
    %c0_4 = arith.constant 0 : index
    %4 = vector.load %arg3[%c0_3, %c0_4] : memref<16x128xf32, #tpu.memory_space<vmem>>, vector<16x128xf32>
    %cst_5 = arith.constant dense<0.000000e+00> : vector<16x128xf32>
    %5 = tpu.matmul %3, %4, %cst_5 {dimension_numbers = #tpu.dot_dimension_numbers<[1], [0], [0], [1], [0, 0, 1, 1], [], []>} : vector<16x16xf32>, vector<16x128xf32>, vector<16x128xf32> -> vector<16x128xf32>
    %6 = arith.addf %2, %5 : vector<16x128xf32>
    %c0_6 = arith.constant 0 : index
    %c0_7 = arith.constant 0 : index
    %7 = vector.load %arg4[%c0_6, %c0_7] : memref<1x128xf32, #tpu.memory_space<vmem>>, vector<1x128xf32>
    %8 = vector.broadcast %7 : vector<1x128xf32> to vector<16x128xf32>
    %9 = arith.subf %6, %8 : vector<16x128xf32>
    %cst_8 = arith.constant dense<0xFF800000> : vector<16xf32>
    %10 = vector.multi_reduction <maximumf>, %9, %cst_8 [1] : vector<16x128xf32> to vector<16xf32>
    %11 = vector.shape_cast %10 : vector<16xf32> to vector<16x1xf32>
    %12 = vector.broadcast %11 : vector<16x1xf32> to vector<16x128xf32>
    %13 = arith.subf %9, %12 : vector<16x128xf32>
    %14 = math.exp %13 : vector<16x128xf32>
    %cst_9 = arith.constant dense<0.000000e+00> : vector<16xf32>
    %15 = vector.multi_reduction <add>, %14, %cst_9 [1] : vector<16x128xf32> to vector<16xf32>
    %16 = vector.shape_cast %15 : vector<16xf32> to vector<16x1xf32>
    %17 = tpu.reciprocal %16 {approx = true} : vector<16x1xf32> -> vector<16x1xf32>
    %18 = arith.mulf %16, %17 : vector<16x1xf32>
    %cst_10 = arith.constant 2.000000e+00 : f32
    %19 = vector.broadcast %cst_10 : f32 to vector<16x1xf32>
    %20 = arith.subf %19, %18 : vector<16x1xf32>
    %21 = arith.mulf %17, %20 : vector<16x1xf32>
    %22 = vector.broadcast %21 : vector<16x1xf32> to vector<16x128xf32>
    %23 = arith.mulf %14, %22 : vector<16x128xf32>
    %c0_11 = arith.constant 0 : index
    %c0_12 = arith.constant 0 : index
    %24 = vector.load %arg5[%c0_11, %c0_12] : memref<16x128xf32, #tpu.memory_space<vmem>>, vector<16x128xf32>
    tpu.vector_store %arg5[%c0_11, %c0_12], %23 {strides = array<i32>} : memref<16x128xf32, #tpu.memory_space<vmem>>, vector<16x128xf32>,
    return
  }
  func.func @transform_0(%arg0: i32) -> (i32, i32) {
    %c0_i32 = arith.constant 0 : i32
    %c0_i32_0 = arith.constant 0 : i32
    return %arg0, %c0_i32 : i32, i32
  }
  func.func @transform_1(%arg0: i32) -> (i32, i32) {
    %c0_i32 = arith.constant 0 : i32
    %c0_i32_0 = arith.constant 0 : i32
    %c0_i32_1 = arith.constant 0 : i32
    return %c0_i32, %c0_i32_0 : i32, i32
  }
  func.func @transform_2(%arg0: i32) -> (i32, i32) {
    %c0_i32 = arith.constant 0 : i32
    %c0_i32_0 = arith.constant 0 : i32
    %c0_i32_1 = arith.constant 0 : i32
    return %c0_i32, %c0_i32_0 : i32, i32
  }
  func.func @transform_3(%arg0: i32) -> (i32, i32) {
    %c0_i32 = arith.constant 0 : i32
    %c0_i32_0 = arith.constant 0 : i32
    %c0_i32_1 = arith.constant 0 : i32
    return %c0_i32, %c0_i32_0 : i32, i32
  }
  func.func @transform_4(%arg0: i32) -> (i32, i32) {
    %c0_i32 = arith.constant 0 : i32
    %c0_i32_0 = arith.constant 0 : i32
    return %arg0, %c0_i32 : i32, i32
  }
}

</mosaic_0001>

<llo_original>
// kernel: tpu_custom_call.1
$region0: #{tpu_custom_call.1}
  #allocation0 [shape = 'u32[]', space=smem, size = 0x4, offset = 0x4, fixed_abs, tag = 'smem constant byte address 0x4 - core index']
  #allocation1 [shape = 'u32[72,128]{1,0:T(1,128)}', space=vmem, size = 0x9000, scoped, tag = 'internal scratch']
  %s0 = inlined_call_operand.hbm [shape: f32[16,16], index: 0, kind: input, shape index: {}]
  %s1 = inlined_call_operand.hbm [shape: f32[16,128], index: 1, kind: input, shape index: {}]
  %s2 = inlined_call_operand.hbm [shape: f32[16,128], index: 2, kind: input, shape index: {}]
  %s3 = inlined_call_operand.vmem [shape: f32[1,128], index: 3, kind: input, shape index: {}]
  %s4 = inlined_call_operand.hbm [shape: f32[16,128], index: 4, kind: output, shape index: {}]
  %s5 = sld [smem:[#allocation0]]
  $region38: #{tpu_custom_call.1} parent=0
    _
  %s7 = ssub.s32 1, %s5
  %s8 = scalar_select 0, %s7, %s5
  $region1: #{tpu_custom_call.1} parent=0
    #allocation2 [shape = 'u8[8192]{0}', space=vmem, size = 0x2000, scoped, tag = 'input window, operand 0, single buffered']
    #allocation3 [shape = 's32[1]{0}', space=sflag, size = 0x4, scoped, tag = 'scoped memory for tpu_custom_call.1']
    #allocation4 [shape = 's32[1]{0}', space=sflag, size = 0x4, scoped, tag = 'scoped memory for tpu_custom_call.1']
    #allocation5 [shape = 'u8[8192]{0}', space=vmem, size = 0x2000, scoped, tag = 'input window, operand 1, single buffered']
    #allocation6 [shape = 's32[1]{0}', space=sflag, size = 0x4, scoped, tag = 'scoped memory for tpu_custom_call.1']
    #allocation7 [shape = 'u8[8192]{0}', space=vmem, size = 0x2000, scoped, tag = 'input window, operand 2, single buffered']
    #allocation8 [shape = 'u8[8192]{0}', space=vmem, size = 0x2000, scoped, tag = 'output window, operand 0, single buffered']
    %9 = vsyncpa [#allocation3], 0
    %10 = vsyncpa [#allocation6], 0
    %11 = vsyncpa [#allocation4], 0
    // Predicated region
    $region2: #{tpu_custom_call.1} parent=1 // pred_check
      _
    $region3: #{tpu_custom_call.1} parent=1 // pred_check_branch
      %13 = sbr.rel (0) target = $region5
    $region4: #{tpu_custom_call.1} parent=1 // pred_region
      %15 = vsyncadd [#allocation3], 0
      %s16 = sshll.u32 %s0, 4
      %s17 = int_to_ptr.hbm [resolvable:$true] %s16
      %s18 = sshll.u32 [#allocation2], 4
      %s19 = int_to_ptr.vmem [resolvable:$true] %s18
      %24 = dma.hbm_to_vmem [thread:$0]  %s17, 256, %s19, [#allocation3], 128, 128, 8
    $region5: #{tpu_custom_call.1} parent=1 // pred_fallthru
      _
    // Predicated region
    $region6: #{tpu_custom_call.1} parent=1 // pred_check
      _
    $region7: #{tpu_custom_call.1} parent=1 // pred_check_branch
      %26 = sbr.rel (0) target = $region9
    $region8: #{tpu_custom_call.1} parent=1 // pred_region
      %28 = vsyncadd [#allocation6], 0
      %s29 = sshll.u32 %s1, 4
      %s30 = int_to_ptr.hbm [resolvable:$true] %s29
      %s31 = sshll.u32 [#allocation5], 4
      %s32 = int_to_ptr.vmem [resolvable:$true] %s31
      %37 = dma.hbm_to_vmem [thread:$0]  %s30, 256, %s32, [#allocation6], 128, 128, 8
    $region9: #{tpu_custom_call.1} parent=1 // pred_fallthru
      _
    // Predicated region
    $region10: #{tpu_custom_call.1} parent=1 // pred_check
      _
    $region11: #{tpu_custom_call.1} parent=1 // pred_check_branch
      %39 = sbr.rel (0) target = $region13
    $region12: #{tpu_custom_call.1} parent=1 // pred_region
      %41 = vsyncadd [#allocation6], 0
      %s42 = sshll.u32 %s2, 4
      %s43 = int_to_ptr.hbm [resolvable:$true] %s42
      %s44 = sshll.u32 [#allocation7], 4
      %s45 = int_to_ptr.vmem [resolvable:$true] %s44
      %50 = dma.hbm_to_vmem [thread:$0]  %s43, 256, %s45, [#allocation6], 128, 128, 8
    $region13: #{tpu_custom_call.1} parent=1 // pred_fallthru
      _
    // Predicated region
    $region14: #{tpu_custom_call.1} parent=1 // pred_check
      _
    $region15: #{tpu_custom_call.1} parent=1 // pred_check_branch
      %52 = sbr.rel (0) target = $region17
    $region16: #{tpu_custom_call.1} parent=1 // pred_region
      _
    $region17: #{tpu_custom_call.1} parent=1 // pred_fallthru
      _
    // Predicated region
    $region18: #{tpu_custom_call.1} parent=1 // pred_check
      _
    $region19: #{tpu_custom_call.1} parent=1 // pred_check_branch
      %54 = sbr.rel (0) target = $region21
    $region20: #{tpu_custom_call.1} parent=1 // pred_region
      %56 = dma.done [#allocation3], 256
    $region21: #{tpu_custom_call.1} parent=1 // pred_fallthru
      _
    // Predicated region
    $region22: #{tpu_custom_call.1} parent=1 // pred_check
      _
    $region23: #{tpu_custom_call.1} parent=1 // pred_check_branch
      %58 = sbr.rel (0) target = $region25
    $region24: #{tpu_custom_call.1} parent=1 // pred_region
      %60 = dma.done [#allocation6], 256
    $region25: #{tpu_custom_call.1} parent=1 // pred_fallthru
      _
    // Predicated region
    $region26: #{tpu_custom_call.1} parent=1 // pred_check
      _
    $region27: #{tpu_custom_call.1} parent=1 // pred_check_branch
      %62 = sbr.rel (0) target = $region29
    $region28: #{tpu_custom_call.1} parent=1 // pred_region
      %64 = dma.done [#allocation6], 256
    $region29: #{tpu_custom_call.1} parent=1 // pred_fallthru
      _
    %v65 = vld [vmem:[#allocation2] sm:$0xff]
    %v66 = vld [vmem:[#allocation2 + $0x8] sm:$0xff]
    %v67 = vld [vmem:[#allocation5] sm:$0xff]
    %v68 = vld [vmem:[#allocation5 + $0x8] sm:$0xff]
    %v69 = vmul.f32 %v65, %v65
    %v70 = vmul.f32 %v66, %v66
    %v71 = vld [vmem:[#allocation7] sm:$0xff]
    %v72 = vld [vmem:[#allocation7 + $0x8] sm:$0xff]
    %vm73 = vcmask 130048
    %v75 = vsel %vm73, %v69, 0
    %v78 = vsel %vm73, %v70, 0
    %80 = vmatpush.msra.mxu0 0.0
    %81 = vmatpush.msra.mxu0 0.0
    %82 = vmatpush.msra.mxu0 0.0
    %83 = vmatpush.msra.mxu0 0.0
    %84 = vmatpush.msra.mxu0 0.0
    %85 = vmatpush.msra.mxu0 0.0
    %86 = vmatpush.msra.mxu0 0.0
    %87 = vmatpush.msra.mxu0 0.0
    %88 = vmatpush.msra.mxu0 0.0
    %89 = vmatpush.msra.mxu0 0.0
    %90 = vmatpush.msra.mxu0 0.0
    %91 = vmatpush.msra.mxu0 0.0
    %92 = vmatpush.msra.mxu0 0.0
    %93 = vmatpush.msra.mxu0 0.0
    %94 = vmatpush.msra.mxu0 %v72
    %95 = vmatpush.msra.mxu0 %v71
    %96 = vmatmul.f32.gmra.mxu0 %v75
    %v97 = vpop.f32.mrf.mxu0
    %v98 = vadd.f32 0.0, %v97
    %99 = vmatmul.f32.gmra.mxu0 %v78
    %v100 = vpop.f32.mrf.mxu0
    %v101 = vadd.f32 0.0, %v100
    %102 = vdwg.mxu0
    %v104 = vsel %vm73, %v65, 0
    %v107 = vsel %vm73, %v66, 0
    %109 = vmatpush.msra.mxu0 0.0
    %110 = vmatpush.msra.mxu0 0.0
    %111 = vmatpush.msra.mxu0 0.0
    %112 = vmatpush.msra.mxu0 0.0
    %113 = vmatpush.msra.mxu0 0.0
    %114 = vmatpush.msra.mxu0 0.0
    %115 = vmatpush.msra.mxu0 0.0
    %116 = vmatpush.msra.mxu0 0.0
    %117 = vmatpush.msra.mxu0 0.0
    %118 = vmatpush.msra.mxu0 0.0
    %119 = vmatpush.msra.mxu0 0.0
    %120 = vmatpush.msra.mxu0 0.0
    %121 = vmatpush.msra.mxu0 0.0
    %122 = vmatpush.msra.mxu0 0.0
    %123 = vmatpush.msra.mxu0 %v68
    %124 = vmatpush.msra.mxu0 %v67
    %125 = vmatmul.f32.gmra.mxu0 %v104
    %v126 = vpop.f32.mrf.mxu0
    %v127 = vadd.f32 %v98, %v126
    %128 = vmatmul.f32.gmra.mxu0 %v107
    %v129 = vpop.f32.mrf.mxu0
    %v130 = vadd.f32 %v101, %v129
    %131 = vdwg.mxu0
    %v132 = vld [vmem:[%s3] sm:$0x1]
    %v134 = vperm.slane %v132, 0
    %v136 = vsub.f32 %v127, %v134
    %v137 = vsub.f32 %v130, %v134
    %138 = vmax.xlane.f32.xlu0 %v136
    %v139 = vpop.xlane.xlu0 %138
    %140 = vmax.xlane.f32.xlu0 %v137
    %v141 = vpop.xlane.xlu0 %140
    %v142 = vsub.f32 %v136, %v139
    %v143 = vsub.f32 %v137, %v141
    %v144 = vmul.f32 %v142, 1.442695
    %v145 = vpow.pop %v144
    %v146 = vmul.f32 %v143, 1.442695
    %v147 = vpow.pop %v146
    %148 = vadd.xlane.f32.xlu0 %v145
    %v149 = vpop.xlane.xlu0 %148
    %150 = vadd.xlane.f32.xlu0 %v147
    %v151 = vpop.xlane.xlu0 %150
    %v152 = vrcp.pop %v149
    %v153 = vrcp.pop %v151
    %v154 = vmul.f32 %v149, %v152
    %v155 = vmul.f32 %v151, %v153
    %v156 = vsub.f32 2.0, %v154
    %v157 = vsub.f32 2.0, %v155
    %v158 = vmul.f32 %v152, %v156
    %v159 = vmul.f32 %v153, %v157
    %v160 = vmul.f32 %v145, %v158
    %v161 = vmul.f32 %v147, %v159
    %162 = vst [vmem:[#allocation8] sm:$0xff] %v160
    %163 = vst [vmem:[#allocation8 + $0x8] sm:$0xff] %v161
    // Predicated region
    $region30: #{tpu_custom_call.1} parent=1 // pred_check
      _
    $region31: #{tpu_custom_call.1} parent=1 // pred_check_branch
      %165 = sbr.rel (0) target = $region33
    $region32: #{tpu_custom_call.1} parent=1 // pred_region
      %167 = vsyncadd [#allocation4], 0
      %s168 = sshll.u32 [#allocation8], 4
      %s169 = int_to_ptr.vmem [resolvable:$true] %s168
      %s170 = sshll.u32 %s4, 4
      %s171 = int_to_ptr.hbm [resolvable:$true] %s170
      %176 = dma.vmem_to_hbm [thread:$0]  %s169, 256, %s171, [#allocation4], 128, 128, 8
    $region33: #{tpu_custom_call.1} parent=1 // pred_fallthru
      _
    // Predicated region
    $region34: #{tpu_custom_call.1} parent=1 // pred_check
      _
    $region35: #{tpu_custom_call.1} parent=1 // pred_check_branch
      %178 = sbr.rel (0) target = $region37
    $region36: #{tpu_custom_call.1} parent=1 // pred_region
      %180 = dma.done [#allocation4], 256
    $region37: #{tpu_custom_call.1} parent=1 // pred_fallthru
      _
    %181 = vsyncpa [#allocation3], 1
    %182 = vsyncpa [#allocation6], 1
    %183 = vsyncpa [#allocation4], 1

</llo_original>
